<compile_context>
chip_gen: v7x
topology: tpu7x:2x2x1
jax: 0.10.0
libtpu: 0.0.40
codegen_flags: <defaults>
</compile_context>

<pallas_src>
import jax
import jax.numpy as jnp
from jax.experimental import pallas as pl
from jax.experimental.pallas import tpu as pltpu


def daft_kernel(x_ref, tab_ref, w1i_ref, w1t_ref, b1_ref,
                wsT_ref, bs_ref, whT_ref, bh_ref, out_ref):
    # x_ref:   [C, S]  one batch element, channels on sublanes, spatial on lanes
    # tab_ref: [T, 1]
    x = x_ref[...]                                               # [C, S]
    gap = jnp.mean(x, axis=1, keepdims=True)                     # [C, 1]  (GAP over D*H*W)
    tab = tab_ref[...]                                           # [T, 1]

    # bottleneck Linear(C+T -> Hd) + ReLU, as split broadcast-multiply + sublane reduces
    #   z[h] = sum_c W1[c,h]*gap[c] + sum_t W1[C+t,h]*tab[t] + b1[h]
    z = (jnp.sum(w1i_ref[...] * gap, axis=0, keepdims=True)      # [1, Hd]
         + jnp.sum(w1t_ref[...] * tab, axis=0, keepdims=True)    # [1, Hd]
         + b1_ref[...])                                          # [1, Hd]
    z = jnp.maximum(z, 0.0)

    # scale / shift heads Linear(Hd -> C), produced directly as [C, 1] columns
    scale = jnp.sum(wsT_ref[...] * z, axis=1, keepdims=True) + bs_ref[...]   # [C, 1]
    shift = jnp.sum(whT_ref[...] * z, axis=1, keepdims=True) + bh_ref[...]   # [C, 1]

    # dynamic affine transform: per-channel scale/shift broadcast over all lanes (spatial)
    out_ref[...] = scale * x + shift                             # [C, S]  lane-dense store


def daft_forward(image_feats, tabular, params):
    """image_feats: [B, C, D, H, W] float32; tabular: [B, T] float32."""
    w1i, w1t, b1, ws, bs, wh, bh = params
    B, C, D, H, W = image_feats.shape
    T = tabular.shape[1]
    Hd = w1i.shape[1]
    S = D * H * W

    # Free views / tiny-weight reshapes only (no big-tensor transposes).
    x = image_feats.reshape(B, C, S)          # [B, C, S]  (NCDHW is already contiguous in S)
    tab = tabular.reshape(B, T, 1)            # [B, T, 1]
    wsT = ws.T                                # [C, Hd]
    whT = wh.T                                # [C, Hd]
    bs_col = bs.reshape(C, 1)                 # [C, 1]
    bh_col = bh.reshape(C, 1)                 # [C, 1]

    # HBM-roofline cost hint: 1 read + 1 write of the big tensor, ~3 flops/element.
    big = B * C * S
    cost = pl.CostEstimate(flops=3 * big, transcendentals=0,
                           bytes_accessed=2 * big * 4)

    # VMEM budget: double-buffered in + out slabs plus the tiny weights; clamp so the
    # request is valid on all generations (v7x has only 64 MiB physical VMEM).
    slab_bytes = C * S * 4
    vmem_need = 4 * slab_bytes + (2 << 20)
    vmem_limit = int(min(max(vmem_need, 32 << 20), 48 << 20))

    out = pl.pallas_call(
        daft_kernel,
        out_shape=jax.ShapeDtypeStruct((B, C, S), jnp.float32),
        grid_spec=pltpu.PrefetchScalarGridSpec(
            num_scalar_prefetch=0,
            grid=(B,),
            in_specs=[
                pl.BlockSpec((None, C, S), lambda b: (b, 0, 0)),   # x, per-batch [C, S] slab
                pl.BlockSpec((None, T, 1), lambda b: (b, 0, 0)),   # tabular column [T, 1]
                pl.BlockSpec((C, Hd), lambda b: (0, 0)),           # W1 (image part)   [C, Hd]
                pl.BlockSpec((T, Hd), lambda b: (0, 0)),           # W1 (tabular part) [T, Hd]
                pl.BlockSpec((1, Hd), lambda b: (0, 0)),           # b1                [1, Hd]
                pl.BlockSpec((C, Hd), lambda b: (0, 0)),           # W_scale^T         [C, Hd]
                pl.BlockSpec((C, 1), lambda b: (0, 0)),            # b_scale (column)  [C, 1]
                pl.BlockSpec((C, Hd), lambda b: (0, 0)),           # W_shift^T         [C, Hd]
                pl.BlockSpec((C, 1), lambda b: (0, 0)),            # b_shift (column)  [C, 1]
            ],
            out_specs=pl.BlockSpec((None, C, S), lambda b: (b, 0, 0)),
        ),
        compiler_params=pltpu.CompilerParams(
            dimension_semantics=("parallel",),
            vmem_limit_bytes=vmem_limit),
        cost_estimate=cost,
    )(x, tab, w1i, w1t, b1, wsT, bs_col, whT, bh_col)

    # Free view back to NCDHW.
    return out.reshape(B, C, D, H, W)


def daft_reference(image_feats, tabular, params):
    """Pure-JAX reference mirroring the PyTorch forward."""
    w1i, w1t, b1, ws, bs, wh, bh = params
    W1 = jnp.concatenate([w1i, w1t], axis=0)
    gap = jnp.mean(image_feats, axis=(2, 3, 4))                   # [B, C]
    combined = jnp.concatenate([gap, tabular], axis=1)            # [B, C+T]
    z = jnp.maximum(combined @ W1 + b1, 0.0)                      # [B, Hd]
    scale = z @ ws + bs                                           # [B, C]
    shift = z @ wh + bh                                           # [B, C]
    scale = scale[:, :, None, None, None]
    shift = shift[:, :, None, None, None]
    return scale * image_feats + shift


if __name__ == "__main__":
    # small shapes consistent with the forward: image feats [B, C, D, H, W], tabular [B, T]
    B, C, D, H, W = 2, 16, 4, 8, 8        # S = D*H*W = 256 (multiple of 128 -> lane-dense)
    T = 8
    bottleneck_factor = 5
    Hd = (C + T) // bottleneck_factor     # = 4

    key = jax.random.PRNGKey(0)
    keys = jax.random.split(key, 10)
    image_feats = jax.random.normal(keys[0], (B, C, D, H, W), dtype=jnp.float32)
    tabular = jax.random.normal(keys[1], (B, T), dtype=jnp.float32)

    # deterministic parameter init (bottleneck Linear, scale Linear, shift Linear)
    W1 = 0.1 * jax.random.normal(keys[2], (C + T, Hd), dtype=jnp.float32)
    b1 = 0.1 * jax.random.normal(keys[3], (1, Hd), dtype=jnp.float32)
    Ws = 0.1 * jax.random.normal(keys[4], (Hd, C), dtype=jnp.float32)
    bs = 0.1 * jax.random.normal(keys[5], (1, C), dtype=jnp.float32)
    Wh = 0.1 * jax.random.normal(keys[6], (Hd, C), dtype=jnp.float32)
    bh = 0.1 * jax.random.normal(keys[7], (1, C), dtype=jnp.float32)
    params = (W1[:C], W1[C:], b1, Ws, bs, Wh, bh)

    out = jax.block_until_ready(daft_forward(image_feats, tabular, params))
    ref = jax.block_until_ready(daft_reference(image_feats, tabular, params))

    assert out.shape == (B, C, D, H, W), out.shape
    assert jnp.allclose(out, ref, rtol=1e-4, atol=1e-4), float(jnp.max(jnp.abs(out - ref)))
    print("KERNEL_OK")
</pallas_src>

<mosaic_0001>
module attributes {stable_mosaic.version = 11 : i64} {
  func.func @daft_kernel(%arg0: i32, %arg1: memref<1x16x256xf32, #tpu.memory_space<vmem>>, %arg2: memref<1x8x1xf32, #tpu.memory_space<vmem>>, %arg3: memref<16x4xf32, #tpu.memory_space<vmem>>, %arg4: memref<8x4xf32, #tpu.memory_space<vmem>>, %arg5: memref<1x4xf32, #tpu.memory_space<vmem>>, %arg6: memref<16x4xf32, #tpu.memory_space<vmem>>, %arg7: memref<16x1xf32, #tpu.memory_space<vmem>>, %arg8: memref<16x4xf32, #tpu.memory_space<vmem>>, %arg9: memref<16x1xf32, #tpu.memory_space<vmem>>, %arg10: memref<1x16x256xf32, #tpu.memory_space<vmem>>) attributes {dimension_semantics = [#tpu.dimension_semantics<parallel>], iteration_bounds = array<i64: 2>, scalar_prefetch = 0 : i64, scratch_operands = 0 : i64, tpu.core_type = #tpu.core_type<tc>, window_params = [{transform_indices = @transform_0, window_bounds = array<i64: 1, 16, 256>}, {transform_indices = @transform_1, window_bounds = array<i64: 1, 8, 1>}, {pipeline_mode = #tpu.pipeline_mode<synchronous>, transform_indices = @transform_2, window_bounds = array<i64: 16, 4>}, {pipeline_mode = #tpu.pipeline_mode<synchronous>, transform_indices = @transform_3, window_bounds = array<i64: 8, 4>}, {pipeline_mode = #tpu.pipeline_mode<synchronous>, transform_indices = @transform_4, window_bounds = array<i64: 1, 4>}, {pipeline_mode = #tpu.pipeline_mode<synchronous>, transform_indices = @transform_5, window_bounds = array<i64: 16, 4>}, {pipeline_mode = #tpu.pipeline_mode<synchronous>, transform_indices = @transform_6, window_bounds = array<i64: 16, 1>}, {pipeline_mode = #tpu.pipeline_mode<synchronous>, transform_indices = @transform_7, window_bounds = array<i64: 16, 4>}, {pipeline_mode = #tpu.pipeline_mode<synchronous>, transform_indices = @transform_8, window_bounds = array<i64: 16, 1>}, {transform_indices = @transform_9, window_bounds = array<i64: 1, 16, 256>}]} {
    %c0 = arith.constant 0 : index
    %c0_0 = arith.constant 0 : index
    %c0_1 = arith.constant 0 : index
    %0 = vector.load %arg1[%c0, %c0_0, %c0_1] : memref<1x16x256xf32, #tpu.memory_space<vmem>>, vector<1x16x256xf32>
    %1 = vector.shape_cast %0 : vector<1x16x256xf32> to vector<16x256xf32>
    %cst = arith.constant dense<0.000000e+00> : vector<16xf32>
    %2 = vector.multi_reduction <add>, %1, %cst [1] : vector<16x256xf32> to vector<16xf32>
    %3 = vector.shape_cast %2 : vector<16xf32> to vector<16x1xf32>
    %cst_2 = arith.constant 2.560000e+02 : f32
    %4 = vector.broadcast %cst_2 : f32 to vector<16x1xf32>
    %5 = arith.divf %3, %4 : vector<16x1xf32>
    %c0_3 = arith.constant 0 : index
    %c0_4 = arith.constant 0 : index
    %c0_5 = arith.constant 0 : index
    %6 = vector.load %arg2[%c0_3, %c0_4, %c0_5] : memref<1x8x1xf32, #tpu.memory_space<vmem>>, vector<1x8x1xf32>
    %7 = vector.shape_cast %6 : vector<1x8x1xf32> to vector<8x1xf32>
    %c0_6 = arith.constant 0 : index
    %c0_7 = arith.constant 0 : index
    %8 = vector.load %arg3[%c0_6, %c0_7] : memref<16x4xf32, #tpu.memory_space<vmem>>, vector<16x4xf32>
    %9 = vector.broadcast %5 : vector<16x1xf32> to vector<16x4xf32>
    %10 = arith.mulf %8, %9 : vector<16x4xf32>
    %cst_8 = arith.constant dense<0.000000e+00> : vector<4xf32>
    %11 = vector.multi_reduction <add>, %10, %cst_8 [0] : vector<16x4xf32> to vector<4xf32>
    %12 = vector.shape_cast %11 : vector<4xf32> to vector<1x4xf32>
    %c0_9 = arith.constant 0 : index
    %c0_10 = arith.constant 0 : index
    %13 = vector.load %arg4[%c0_9, %c0_10] : memref<8x4xf32, #tpu.memory_space<vmem>>, vector<8x4xf32>
    %14 = vector.broadcast %7 : vector<8x1xf32> to vector<8x4xf32>
    %15 = arith.mulf %13, %14 : vector<8x4xf32>
    %cst_11 = arith.constant dense<0.000000e+00> : vector<4xf32>
    %16 = vector.multi_reduction <add>, %15, %cst_11 [0] : vector<8x4xf32> to vector<4xf32>
    %17 = vector.shape_cast %16 : vector<4xf32> to vector<1x4xf32>
    %18 = arith.addf %12, %17 : vector<1x4xf32>
    %c0_12 = arith.constant 0 : index
    %c0_13 = arith.constant 0 : index
    %19 = vector.load %arg5[%c0_12, %c0_13] : memref<1x4xf32, #tpu.memory_space<vmem>>, vector<1x4xf32>
    %20 = arith.addf %18, %19 : vector<1x4xf32>
    %cst_14 = arith.constant 0.000000e+00 : f32
    %21 = vector.broadcast %cst_14 : f32 to vector<1x4xf32>
    %22 = arith.maximumf %20, %21 : vector<1x4xf32>
    %c0_15 = arith.constant 0 : index
    %c0_16 = arith.constant 0 : index
    %23 = vector.load %arg6[%c0_15, %c0_16] : memref<16x4xf32, #tpu.memory_space<vmem>>, vector<16x4xf32>
    %24 = vector.broadcast %22 : vector<1x4xf32> to vector<16x4xf32>
    %25 = arith.mulf %23, %24 : vector<16x4xf32>
    %cst_17 = arith.constant dense<0.000000e+00> : vector<16xf32>
    %26 = vector.multi_reduction <add>, %25, %cst_17 [1] : vector<16x4xf32> to vector<16xf32>
    %27 = vector.shape_cast %26 : vector<16xf32> to vector<16x1xf32>
    %c0_18 = arith.constant 0 : index
    %c0_19 = arith.constant 0 : index
    %28 = vector.load %arg7[%c0_18, %c0_19] : memref<16x1xf32, #tpu.memory_space<vmem>>, vector<16x1xf32>
    %29 = arith.addf %27, %28 : vector<16x1xf32>
    %c0_20 = arith.constant 0 : index
    %c0_21 = arith.constant 0 : index
    %30 = vector.load %arg8[%c0_20, %c0_21] : memref<16x4xf32, #tpu.memory_space<vmem>>, vector<16x4xf32>
    %31 = vector.broadcast %22 : vector<1x4xf32> to vector<16x4xf32>
    %32 = arith.mulf %30, %31 : vector<16x4xf32>
    %cst_22 = arith.constant dense<0.000000e+00> : vector<16xf32>
    %33 = vector.multi_reduction <add>, %32, %cst_22 [1] : vector<16x4xf32> to vector<16xf32>
    %34 = vector.shape_cast %33 : vector<16xf32> to vector<16x1xf32>
    %c0_23 = arith.constant 0 : index
    %c0_24 = arith.constant 0 : index
    %35 = vector.load %arg9[%c0_23, %c0_24] : memref<16x1xf32, #tpu.memory_space<vmem>>, vector<16x1xf32>
    %36 = arith.addf %34, %35 : vector<16x1xf32>
    %37 = vector.broadcast %29 : vector<16x1xf32> to vector<16x256xf32>
    %38 = arith.mulf %37, %1 : vector<16x256xf32>
    %39 = vector.broadcast %36 : vector<16x1xf32> to vector<16x256xf32>
    %40 = arith.addf %38, %39 : vector<16x256xf32>
    %c0_25 = arith.constant 0 : index
    %c0_26 = arith.constant 0 : index
    %c0_27 = arith.constant 0 : index
    %41 = vector.load %arg10[%c0_25, %c0_26, %c0_27] : memref<1x16x256xf32, #tpu.memory_space<vmem>>, vector<1x16x256xf32>
    %42 = vector.shape_cast %41 : vector<1x16x256xf32> to vector<16x256xf32>
    %43 = vector.shape_cast %40 : vector<16x256xf32> to vector<1x16x256xf32>
    tpu.vector_store %arg10[%c0_25, %c0_26, %c0_27], %43 {strides = array<i32>} : memref<1x16x256xf32, #tpu.memory_space<vmem>>, vector<1x16x256xf32>,
    return
  }
  func.func @transform_0(%arg0: i32) -> (i32, i32, i32) {
    %c0_i32 = arith.constant 0 : i32
    %c0_i32_0 = arith.constant 0 : i32
    %c0_i32_1 = arith.constant 0 : i32
    return %arg0, %c0_i32, %c0_i32_0 : i32, i32, i32
  }
  func.func @transform_1(%arg0: i32) -> (i32, i32, i32) {
    %c0_i32 = arith.constant 0 : i32
    %c0_i32_0 = arith.constant 0 : i32
    %c0_i32_1 = arith.constant 0 : i32
    return %arg0, %c0_i32, %c0_i32_0 : i32, i32, i32
  }
  func.func @transform_2(%arg0: i32) -> (i32, i32) {
    %c0_i32 = arith.constant 0 : i32
    %c0_i32_0 = arith.constant 0 : i32
    %c0_i32_1 = arith.constant 0 : i32
    return %c0_i32, %c0_i32_0 : i32, i32
  }
  func.func @transform_3(%arg0: i32) -> (i32, i32) {
    %c0_i32 = arith.constant 0 : i32
    %c0_i32_0 = arith.constant 0 : i32
    %c0_i32_1 = arith.constant 0 : i32
    return %c0_i32, %c0_i32_0 : i32, i32
  }
  func.func @transform_4(%arg0: i32) -> (i32, i32) {
    %c0_i32 = arith.constant 0 : i32
    %c0_i32_0 = arith.constant 0 : i32
    %c0_i32_1 = arith.constant 0 : i32
    return %c0_i32, %c0_i32_0 : i32, i32
  }
  func.func @transform_5(%arg0: i32) -> (i32, i32) {
    %c0_i32 = arith.constant 0 : i32
    %c0_i32_0 = arith.constant 0 : i32
    %c0_i32_1 = arith.constant 0 : i32
    return %c0_i32, %c0_i32_0 : i32, i32
  }
  func.func @transform_6(%arg0: i32) -> (i32, i32) {
    %c0_i32 = arith.constant 0 : i32
    %c0_i32_0 = arith.constant 0 : i32
    %c0_i32_1 = arith.constant 0 : i32
    return %c0_i32, %c0_i32_0 : i32, i32
  }
  func.func @transform_7(%arg0: i32) -> (i32, i32) {
    %c0_i32 = arith.constant 0 : i32
    %c0_i32_0 = arith.constant 0 : i32
    %c0_i32_1 = arith.constant 0 : i32
    return %c0_i32, %c0_i32_0 : i32, i32
  }
  func.func @transform_8(%arg0: i32) -> (i32, i32) {
    %c0_i32 = arith.constant 0 : i32
    %c0_i32_0 = arith.constant 0 : i32
    %c0_i32_1 = arith.constant 0 : i32
    return %c0_i32, %c0_i32_0 : i32, i32
  }
  func.func @transform_9(%arg0: i32) -> (i32, i32, i32) {
    %c0_i32 = arith.constant 0 : i32
    %c0_i32_0 = arith.constant 0 : i32
    %c0_i32_1 = arith.constant 0 : i32
    return %arg0, %c0_i32, %c0_i32_0 : i32, i32, i32
  }
}

</mosaic_0001>

<llo_original>
// kernel: tpu_custom_call.1
$region0: #{tpu_custom_call.1}
  #allocation0 [shape = 'u32[]', space=smem, size = 0x4, offset = 0x4, fixed_abs, tag = 'smem constant byte address 0x4 - core index']
  #allocation1 [shape = 'u32[144,128]{1,0:T(1,128)}', space=vmem, size = 0x12000, scoped, tag = 'internal scratch']
  %s0 = inlined_call_operand.vmem [shape: f32[2,16,256], index: 0, kind: input, shape index: {}]
  %s1 = inlined_call_operand.vmem [shape: f32[2,8,1], index: 1, kind: input, shape index: {}]
  %s2 = inlined_call_operand.vmem [shape: f32[16,4], index: 2, kind: input, shape index: {}]
  %s3 = inlined_call_operand.vmem [shape: f32[8,4], index: 3, kind: input, shape index: {}]
  %s4 = inlined_call_operand.vmem [shape: f32[1,4], index: 4, kind: input, shape index: {}]
  %s5 = inlined_call_operand.vmem [shape: f32[16,4], index: 5, kind: input, shape index: {}]
  %s6 = inlined_call_operand.vmem [shape: f32[16,1], index: 6, kind: input, shape index: {}]
  %s7 = inlined_call_operand.vmem [shape: f32[16,4], index: 7, kind: input, shape index: {}]
  %s8 = inlined_call_operand.vmem [shape: f32[16,1], index: 8, kind: input, shape index: {}]
  %s9 = inlined_call_operand.hbm [shape: f32[2,16,256], index: 9, kind: output, shape index: {}]
  %s10 = sld [smem:[#allocation0]]
  $region69: #{tpu_custom_call.1} parent=0
    _
  %s12 = ssub.s32 1, %s10
  %s13 = scalar_select 0, %s12, %s10
  $region1: #{tpu_custom_call.1} parent=0
    #allocation2 [shape = 'u8[32768]{0}', space=vmem, size = 0x8000, scoped, tag = 'output window, operand 0']
    #allocation3 [shape = 's32[2]{0}', space=sflag, size = 0x8, scoped, tag = 'scoped memory for tpu_custom_call.1']
    %14 = vsyncpa [#allocation3], 0
    %s15 = scalar_lea.sflag [#allocation3], 1
    %16 = vsyncpa %s15, 0
    loop: start=0, step=1, limit=4
    $region2: #{tpu_custom_call.1} parent=1 // loop_pre_header
      _
    $region3: #{tpu_custom_call.1} parent=1 // loop_header
      %s18 = sphi 0, %s22
      %p19 = scmp.ge.s32.totalorder %s18, 4
      %s28 = sphi 0, %s30
      %s31 = sphi 0, %s28
      %s32 = sphi 0, %s31
      %s48 = sphi 0, %s32
      %s54 = sphi 0, %s56
      %s57 = sphi 0, %s54
      %s58 = sphi 0, %s57
      %s74 = sphi 0, %s58
      %s78 = sphi 0, %s78
      %s80 = sphi 0, %s78
      %s81 = sphi 0, %s80
      %s95 = sphi 0, %s81
      %s99 = sphi 0, %s99
      %s101 = sphi 0, %s99
      %s102 = sphi 0, %s101
      %s116 = sphi 0, %s102
      %s120 = sphi 0, %s120
      %s122 = sphi 0, %s120
      %s123 = sphi 0, %s122
      %s137 = sphi 0, %s123
      %s141 = sphi 0, %s141
      %s143 = sphi 0, %s141
      %s144 = sphi 0, %s143
      %s158 = sphi 0, %s144
      %s162 = sphi 0, %s162
      %s164 = sphi 0, %s162
      %s165 = sphi 0, %s164
      %s179 = sphi 0, %s165
      %s183 = sphi 0, %s183
      %s185 = sphi 0, %s183
      %s186 = sphi 0, %s185
      %s200 = sphi 0, %s186
      %s204 = sphi 0, %s204
      %s206 = sphi 0, %s204
      %s207 = sphi 0, %s206
      %s221 = sphi 0, %s207
      %s227 = sphi 0, %s229
      %s230 = sphi 0, %s227
      %s231 = sphi 0, %s230
      %s247 = sphi 0, %s231
    $region4: #{tpu_custom_call.1} parent=1 // loop_header_branch
      %21 = sbr.rel (%p19) target = $region8
    $region5: #{tpu_custom_call.1} parent=1 // loop_body
      %s23 = ssub.s32 %s18, 1
      %s24 = ssub.s32 %s18, 2
      %s25 = sadd.s32 %s18, 1
      %s26 = ssub.s32 %s18, %s25
      %p27 = scmp.eq.s32.totalorder %s26, 0
      %s29 = sadd.s32 %s28, 1
      %s30 = scalar_select %p27, %s28, %s29
      %p33 = pneg %p27
      %p34 = scmp.eq.s32.totalorder %s18, 1
      %p35 = por %p33, %p34
      %p36 = scmp.ne.s32.totalorder %s28, %s31
      %p37 = scmp.eq.s32.totalorder %s18, 0
      %p38 = por %p36, %p37
      %p39 = scmp.ne.s32.totalorder %s28, %s31
      %p40 = scmp.eq.s32.totalorder %s23, 1
      %p41 = por %p39, %p40
      %p42 = scmp.ne.s32.totalorder %s31, %s32
      %p43 = scmp.eq.s32.totalorder %s23, 0
      %p44 = por %p42, %p43
      %p45 = scmp.ne.s32.totalorder %s31, %s32
      %p46 = scmp.eq.s32.totalorder %s24, 1
      %p47 = por %p45, %p46
      %p49 = scmp.ne.s32.totalorder %s32, %s48
      %p50 = scmp.eq.s32.totalorder %s24, 0
      %p51 = por %p49, %p50
      %s52 = ssub.s32 %s18, %s25
      %p53 = scmp.eq.s32.totalorder %s52, 0
      %s55 = sadd.s32 %s54, 1
      %s56 = scalar_select %p53, %s54, %s55
      %p59 = pneg %p53
      %p60 = scmp.eq.s32.totalorder %s18, 1
      %p61 = por %p59, %p60
      %p62 = scmp.ne.s32.totalorder %s54, %s57
      %p63 = scmp.eq.s32.totalorder %s18, 0
      %p64 = por %p62, %p63
      %p65 = scmp.ne.s32.totalorder %s54, %s57
      %p66 = scmp.eq.s32.totalorder %s23, 1
      %p67 = por %p65, %p66
      %p68 = scmp.ne.s32.totalorder %s57, %s58
      %p69 = scmp.eq.s32.totalorder %s23, 0
      %p70 = por %p68, %p69
      %p71 = scmp.ne.s32.totalorder %s57, %s58
      %p72 = scmp.eq.s32.totalorder %s24, 1
      %p73 = por %p71, %p72
      %p75 = scmp.ne.s32.totalorder %s58, %s74
      %p76 = scmp.eq.s32.totalorder %s24, 0
      %p77 = por %p75, %p76
      %s79 = sadd.s32 %s78, 1
      %p82 = scmp.eq.s32.totalorder %s18, 1
      %p83 = scmp.ne.s32.totalorder %s78, %s80
      %p84 = scmp.eq.s32.totalorder %s18, 0
      %p85 = por %p83, %p84
      %p86 = scmp.ne.s32.totalorder %s78, %s80
      %p87 = scmp.eq.s32.totalorder %s23, 1
      %p88 = por %p86, %p87
      %p89 = scmp.ne.s32.totalorder %s80, %s81
      %p90 = scmp.eq.s32.totalorder %s23, 0
      %p91 = por %p89, %p90
      %p92 = scmp.ne.s32.totalorder %s80, %s81
      %p93 = scmp.eq.s32.totalorder %s24, 1
      %p94 = por %p92, %p93
      %p96 = scmp.ne.s32.totalorder %s81, %s95
      %p97 = scmp.eq.s32.totalorder %s24, 0
      %p98 = por %p96, %p97
      %s100 = sadd.s32 %s99, 1
      %p103 = scmp.eq.s32.totalorder %s18, 1
      %p104 = scmp.ne.s32.totalorder %s99, %s101
      %p105 = scmp.eq.s32.totalorder %s18, 0
      %p106 = por %p104, %p105
      %p107 = scmp.ne.s32.totalorder %s99, %s101
      %p108 = scmp.eq.s32.totalorder %s23, 1
      %p109 = por %p107, %p108
      %p110 = scmp.ne.s32.totalorder %s101, %s102
      %p111 = scmp.eq.s32.totalorder %s23, 0
      %p112 = por %p110, %p111
      %p113 = scmp.ne.s32.totalorder %s101, %s102
      %p114 = scmp.eq.s32.totalorder %s24, 1
      %p115 = por %p113, %p114
      %p117 = scmp.ne.s32.totalorder %s102, %s116
      %p118 = scmp.eq.s32.totalorder %s24, 0
      %p119 = por %p117, %p118
      %s121 = sadd.s32 %s120, 1
      %p124 = scmp.eq.s32.totalorder %s18, 1
      %p125 = scmp.ne.s32.totalorder %s120, %s122
      %p126 = scmp.eq.s32.totalorder %s18, 0
      %p127 = por %p125, %p126
      %p128 = scmp.ne.s32.totalorder %s120, %s122
      %p129 = scmp.eq.s32.totalorder %s23, 1
      %p130 = por %p128, %p129
      %p131 = scmp.ne.s32.totalorder %s122, %s123
      %p132 = scmp.eq.s32.totalorder %s23, 0
      %p133 = por %p131, %p132
      %p134 = scmp.ne.s32.totalorder %s122, %s123
      %p135 = scmp.eq.s32.totalorder %s24, 1
      %p136 = por %p134, %p135
      %p138 = scmp.ne.s32.totalorder %s123, %s137
      %p139 = scmp.eq.s32.totalorder %s24, 0
      %p140 = por %p138, %p139
      %s142 = sadd.s32 %s141, 1
      %p145 = scmp.eq.s32.totalorder %s18, 1
      %p146 = scmp.ne.s32.totalorder %s141, %s143
      %p147 = scmp.eq.s32.totalorder %s18, 0
      %p148 = por %p146, %p147
      %p149 = scmp.ne.s32.totalorder %s141, %s143
      %p150 = scmp.eq.s32.totalorder %s23, 1
      %p151 = por %p149, %p150
      %p152 = scmp.ne.s32.totalorder %s143, %s144
      %p153 = scmp.eq.s32.totalorder %s23, 0
      %p154 = por %p152, %p153
      %p155 = scmp.ne.s32.totalorder %s143, %s144
      %p156 = scmp.eq.s32.totalorder %s24, 1
      %p157 = por %p155, %p156
      %p159 = scmp.ne.s32.totalorder %s144, %s158
      %p160 = scmp.eq.s32.totalorder %s24, 0
      %p161 = por %p159, %p160
      %s163 = sadd.s32 %s162, 1
      %p166 = scmp.eq.s32.totalorder %s18, 1
      %p167 = scmp.ne.s32.totalorder %s162, %s164
      %p168 = scmp.eq.s32.totalorder %s18, 0
      %p169 = por %p167, %p168
      %p170 = scmp.ne.s32.totalorder %s162, %s164
      %p171 = scmp.eq.s32.totalorder %s23, 1
      %p172 = por %p170, %p171
      %p173 = scmp.ne.s32.totalorder %s164, %s165
      %p174 = scmp.eq.s32.totalorder %s23, 0
      %p175 = por %p173, %p174
      %p176 = scmp.ne.s32.totalorder %s164, %s165
      %p177 = scmp.eq.s32.totalorder %s24, 1
      %p178 = por %p176, %p177
      %p180 = scmp.ne.s32.totalorder %s165, %s179
      %p181 = scmp.eq.s32.totalorder %s24, 0
      %p182 = por %p180, %p181
      %s184 = sadd.s32 %s183, 1
      %p187 = scmp.eq.s32.totalorder %s18, 1
      %p188 = scmp.ne.s32.totalorder %s183, %s185
      %p189 = scmp.eq.s32.totalorder %s18, 0
      %p190 = por %p188, %p189
      %p191 = scmp.ne.s32.totalorder %s183, %s185
      %p192 = scmp.eq.s32.totalorder %s23, 1
      %p193 = por %p191, %p192
      %p194 = scmp.ne.s32.totalorder %s185, %s186
      %p195 = scmp.eq.s32.totalorder %s23, 0
      %p196 = por %p194, %p195
      %p197 = scmp.ne.s32.totalorder %s185, %s186
      %p198 = scmp.eq.s32.totalorder %s24, 1
      %p199 = por %p197, %p198
      %p201 = scmp.ne.s32.totalorder %s186, %s200
      %p202 = scmp.eq.s32.totalorder %s24, 0
      %p203 = por %p201, %p202
      %s205 = sadd.s32 %s204, 1
      %p208 = scmp.eq.s32.totalorder %s18, 1
      %p209 = scmp.ne.s32.totalorder %s204, %s206
      %p210 = scmp.eq.s32.totalorder %s18, 0
      %p211 = por %p209, %p210
      %p212 = scmp.ne.s32.totalorder %s204, %s206
      %p213 = scmp.eq.s32.totalorder %s23, 1
      %p214 = por %p212, %p213
      %p215 = scmp.ne.s32.totalorder %s206, %s207
      %p216 = scmp.eq.s32.totalorder %s23, 0
      %p217 = por %p215, %p216
      %p218 = scmp.ne.s32.totalorder %s206, %s207
      %p219 = scmp.eq.s32.totalorder %s24, 1
      %p220 = por %p218, %p219
      %p222 = scmp.ne.s32.totalorder %s207, %s221
      %p223 = scmp.eq.s32.totalorder %s24, 0
      %p224 = por %p222, %p223
      %s225 = ssub.s32 %s18, %s25
      %p226 = scmp.eq.s32.totalorder %s225, 0
      %s228 = sadd.s32 %s227, 1
      %s229 = scalar_select %p226, %s227, %s228
      %p232 = pneg %p226
      %p233 = scmp.eq.s32.totalorder %s18, 1
      %p234 = por %p232, %p233
      %p235 = scmp.ne.s32.totalorder %s227, %s230
      %p236 = scmp.eq.s32.totalorder %s18, 0
      %p237 = por %p235, %p236
      %p238 = scmp.ne.s32.totalorder %s227, %s230
      %p239 = scmp.eq.s32.totalorder %s23, 1
      %p240 = por %p238, %p239
      %p241 = scmp.ne.s32.totalorder %s230, %s231
      %p242 = scmp.eq.s32.totalorder %s23, 0
      %p243 = por %p241, %p242
      %p244 = scmp.ne.s32.totalorder %s230, %s231
      %p245 = scmp.eq.s32.totalorder %s24, 1
      %p246 = por %p244, %p245
      %p248 = scmp.ne.s32.totalorder %s231, %s247
      %p249 = scmp.eq.s32.totalorder %s24, 0
      %p250 = por %p248, %p249
      %p251 = scmp.le.s32.totalorder 1, %s18
      %p252 = scmp.lt.s32.totalorder %s18, 3
      %p253 = pnand %p251, %p252
      %p254 = pneg %p253
      // Predicated region
      $region9: #{tpu_custom_call.1} parent=5 // pred_check
        _
      $region10: #{tpu_custom_call.1} parent=5 // pred_check_branch
        %256 = sbr.rel (%p253) target = $region12
      $region11: #{tpu_custom_call.1} parent=5 // pred_region
        %s257 = ssub.s32 %s18, 1
        // Predicated region
        $region13: #{tpu_custom_call.1} parent=11 // pred_check
          %p258 = pneg %p91
        $region14: #{tpu_custom_call.1} parent=11 // pred_check_branch
          %260 = sbr.rel (%p258) target = $region16
        $region15: #{tpu_custom_call.1} parent=11 // pred_region
          _
        $region16: #{tpu_custom_call.1} parent=11 // pred_fallthru
          _
        // Predicated region
        $region17: #{tpu_custom_call.1} parent=11 // pred_check
          %p261 = pneg %p112
        $region18: #{tpu_custom_call.1} parent=11 // pred_check_branch
          %263 = sbr.rel (%p261) target = $region20
        $region19: #{tpu_custom_call.1} parent=11 // pred_region
          _
        $region20: #{tpu_custom_call.1} parent=11 // pred_fallthru
          _
        // Predicated region
        $region21: #{tpu_custom_call.1} parent=11 // pred_check
          %p264 = pneg %p133
        $region22: #{tpu_custom_call.1} parent=11 // pred_check_branch
          %266 = sbr.rel (%p264) target = $region24
        $region23: #{tpu_custom_call.1} parent=11 // pred_region
          _
        $region24: #{tpu_custom_call.1} parent=11 // pred_fallthru
          _
        // Predicated region
        $region25: #{tpu_custom_call.1} parent=11 // pred_check
          %p267 = pneg %p154
        $region26: #{tpu_custom_call.1} parent=11 // pred_check_branch
          %269 = sbr.rel (%p267) target = $region28
        $region27: #{tpu_custom_call.1} parent=11 // pred_region
          _
        $region28: #{tpu_custom_call.1} parent=11 // pred_fallthru
          _
        // Predicated region
        $region29: #{tpu_custom_call.1} parent=11 // pred_check
          %p270 = pneg %p175
        $region30: #{tpu_custom_call.1} parent=11 // pred_check_branch
          %272 = sbr.rel (%p270) target = $region32
        $region31: #{tpu_custom_call.1} parent=11 // pred_region
          _
        $region32: #{tpu_custom_call.1} parent=11 // pred_fallthru
          _
        // Predicated region
        $region33: #{tpu_custom_call.1} parent=11 // pred_check
          %p273 = pneg %p196
        $region34: #{tpu_custom_call.1} parent=11 // pred_check_branch
          %275 = sbr.rel (%p273) target = $region36
        $region35: #{tpu_custom_call.1} parent=11 // pred_region
          _
        $region36: #{tpu_custom_call.1} parent=11 // pred_fallthru
          _
        // Predicated region
        $region37: #{tpu_custom_call.1} parent=11 // pred_check
          %p276 = pneg %p217
        $region38: #{tpu_custom_call.1} parent=11 // pred_check_branch
          %278 = sbr.rel (%p276) target = $region40
        $region39: #{tpu_custom_call.1} parent=11 // pred_region
          _
        $region40: #{tpu_custom_call.1} parent=11 // pred_fallthru
          _
      $region12: #{tpu_custom_call.1} parent=5 // pred_fallthru
        _
      %p279 = scmp.lt.s32.totalorder %s18, 2
      // Predicated region
      $region41: #{tpu_custom_call.1} parent=5 // pred_check
        %p280 = pneg %p279
      $region42: #{tpu_custom_call.1} parent=5 // pred_check_branch
        %282 = sbr.rel (%p280) target = $region44
      $region43: #{tpu_custom_call.1} parent=5 // pred_region
        // Predicated region
        $region45: #{tpu_custom_call.1} parent=43 // pred_check
          %p283 = pneg %p38
        $region46: #{tpu_custom_call.1} parent=43 // pred_check_branch
          %285 = sbr.rel (%p283) target = $region48
        $region47: #{tpu_custom_call.1} parent=43 // pred_region
          %p286 = scmp.lt.s32.totalorder %s18, 1
          %s287 = scalar_select %p286, %s18, 1
          %s288 = smul.addr %s287, 4
          %s289 = smul.addr %s288, 8
          %s290 = scalar_lea.vmem %s0, %s289
        $region48: #{tpu_custom_call.1} parent=43 // pred_fallthru
          _
        // Predicated region
        $region49: #{tpu_custom_call.1} parent=43 // pred_check
          %p291 = pneg %p64
        $region50: #{tpu_custom_call.1} parent=43 // pred_check_branch
          %293 = sbr.rel (%p291) target = $region52
        $region51: #{tpu_custom_call.1} parent=43 // pred_region
          %p294 = scmp.lt.s32.totalorder %s18, 1
          %s295 = scalar_select %p294, %s18, 1
          %s296 = smul.addr %s295, 8
          %s297 = scalar_lea.vmem %s1, %s296
        $region52: #{tpu_custom_call.1} parent=43 // pred_fallthru
          _
      $region44: #{tpu_custom_call.1} parent=5 // pred_fallthru
        _
      %p298 = scmp.le.s32.totalorder 1, %s18
      %p299 = scmp.lt.s32.totalorder %s18, 3
      %p300 = pnand %p298, %p299
      %p301 = pneg %p300
      // Predicated region
      $region53: #{tpu_custom_call.1} parent=5 // pred_check
        _
      $region54: #{tpu_custom_call.1} parent=5 // pred_check_branch
        %303 = sbr.rel (%p300) target = $region56
      $region55: #{tpu_custom_call.1} parent=5 // pred_region
        %s304 = ssub.s32 %s18, 1
        %p305 = scmp.lt.s32.totalorder %s23, 1
        %s306 = scalar_select %p305, %s23, 1
        %s307 = smul.addr %s306, 4
        %s308 = smul.addr %s307, 8
        %s309 = scalar_lea.vmem %s0, %s308
        %p310 = pneg %p44
        %p311 = pneg %p41
        %p312 = scmp.lt.s32.totalorder %s23, 1
        %s313 = scalar_select %p312, %s23, 1
        %s314 = smul.addr %s313, 8
        %s315 = scalar_lea.vmem %s1, %s314
        %p316 = pneg %p70
        %p317 = pneg %p67
        %p318 = pneg %p91
        %p319 = pneg %p88
        %p320 = pneg %p112
        %p321 = pneg %p109
        %p322 = pneg %p133
        %p323 = pneg %p130
        %p324 = pneg %p154
        %p325 = pneg %p151
        %p326 = pneg %p175
        %p327 = pneg %p172
        %p328 = pneg %p196
        %p329 = pneg %p193
        %p330 = pneg %p217
        %p331 = pneg %p214
        %p332 = pneg %p243
        %p333 = pneg %p240
        %s334 = sand.u32 %s230, 1
        %s335 = scalar_lea.sflag [#allocation3], %s334
        %s336 = sand.u32 %s230, 1
        %s337 = smul.addr %s336, 32
        %s338 = scalar_lea.vmem [#allocation2], %s337
        %p339 = scmp.lt.s32.totalorder %s23, 1
        %s340 = scalar_select %p339, %s23, 1
        %s341 = smul.addr %s340, 4
        %s342 = smul.addr %s341, 8
        %s343 = scalar_lea.vmem %s0, %s342
        %p344 = scmp.lt.s32.totalorder %s23, 1
        %s345 = scalar_select %p344, %s23, 1
        %s346 = smul.addr %s345, 8
        %s347 = scalar_lea.vmem %s1, %s346
        %v348 = vld [vmem:[%s343] sm:$0xff]
        %v349 = vld [vmem:[%s343 + $0x8] sm:$0xff]
        %v350 = vld [vmem:[%s343 + $0x10] sm:$0xff]
        %v351 = vld [vmem:[%s343 + $0x18] sm:$0xff]
        %v352 = vadd.f32 %v348, %v349
        %353 = vadd.xlane.f32.xlu0 %v352
        %v354 = vpop.xlane.xlu0 %353
        %v355 = vadd.f32 %v350, %v351
        %356 = vadd.xlane.f32.xlu0 %v355
        %v357 = vpop.xlane.xlu0 %356
        %v358 = vrcp.pop 256.0
        %v359 = vmul.f32 %v354, %v358
        %v360 = vmul.f32 %v357, %v358
        %v361 = vld [vmem:[%s347] sm:$0xff]
        %v362 = vld [vmem:[%s2] sm:$0xff]
        %v363 = vld [vmem:[%s2 + $0x8] sm:$0xff]
        %v364 = vmul.f32 %v362, %v359
        %v365 = vmul.f32 %v363, %v360
        %vm366 = vcmask 31744
        %v367 = vsel %vm366, %v364, 0.0
        %v368 = vsel %vm366, %v365, 0.0
        %v369 = vadd.f32 %v367, %v368
        %v370 = vrot.slane %v369, 4
        %v371 = vadd.f32 %v369, %v370
        %v372 = vrot.slane %v371, 2
        %v373 = vadd.f32 %v371, %v372
        %v374 = vrot.slane %v373, 1
        %v375 = vadd.f32 %v373, %v374
        %v376 = vld [vmem:[%s3] sm:$0xff]
        %378 = vset.pattern.permute.xlu0 0
        %379 = vperm.xlu0 %378, %v361
        %v380 = vpop.permute.xlu0 %379
        %v382 = vmul.f32 %v376, %v380
        %v383 = vsel %vm366, %v382, 0.0
        %v384 = vrot.slane %v383, 4
        %v385 = vadd.f32 %v383, %v384
        %v386 = vrot.slane %v385, 2
        %v387 = vadd.f32 %v385, %v386
        %v388 = vrot.slane %v387, 1
        %v389 = vadd.f32 %v387, %v388
        %v390 = vadd.f32 %v375, %v389
        %v391 = vld [vmem:[%s4] sm:$0x1]
        %v392 = vadd.f32 %v390, %v391
        %v393 = vmax.f32 %v392, 0.0
        %v394 = vld [vmem:[%s5] sm:$0xff]
        %v395 = vld [vmem:[%s5 + $0x8] sm:$0xff]
        %v396 = vlaneseq
        %v397 = vshrl.u32 %v396, 7
        %v398 = vsub.s32 0, %v397
        %v399 = vrot.slane %v393, %v398
        %v400 = vmul.f32 %v394, %v399
        %v401 = vmul.f32 %v395, %v399
        %v402 = vsel %vm366, %v400, 0.0
        %403 = vadd.xlane.f32.xlu0 %v402
        %v404 = vpop.xlane.xlu0 %403
        %v405 = vsel %vm366, %v401, 0.0
        %406 = vadd.xlane.f32.xlu0 %v405
        %v407 = vpop.xlane.xlu0 %406
        %v408 = vld [vmem:[%s6] sm:$0xff]
        %v409 = vld [vmem:[%s6 + $0x8] sm:$0xff]
        %v410 = vadd.f32 %v404, %v408
        %v411 = vadd.f32 %v407, %v409
        %v412 = vld [vmem:[%s7] sm:$0xff]
        %v413 = vld [vmem:[%s7 + $0x8] sm:$0xff]
        %v414 = vmul.f32 %v412, %v399
        %v415 = vmul.f32 %v413, %v399
        %v416 = vsel %vm366, %v414, 0.0
        %417 = vadd.xlane.f32.xlu0 %v416
        %v418 = vpop.xlane.xlu0 %417
        %v419 = vsel %vm366, %v415, 0.0
        %420 = vadd.xlane.f32.xlu0 %v419
        %v421 = vpop.xlane.xlu0 %420
        %v422 = vld [vmem:[%s8] sm:$0xff]
        %v423 = vld [vmem:[%s8 + $0x8] sm:$0xff]
        %v424 = vadd.f32 %v418, %v422
        %v425 = vadd.f32 %v421, %v423
        %427 = vset.pattern.permute.xlu0 0
        %428 = vperm.xlu0 %427, %v410
        %v429 = vpop.permute.xlu0 %428
        %432 = vset.pattern.permute.xlu0 0
        %433 = vperm.xlu0 %432, %v411
        %v434 = vpop.permute.xlu0 %433
        %v436 = vmul.f32 %v429, %v348
        %v437 = vmul.f32 %v429, %v349
        %v438 = vmul.f32 %v434, %v350
        %v439 = vmul.f32 %v434, %v351
        %441 = vset.pattern.permute.xlu0 0
        %442 = vperm.xlu0 %441, %v424
        %v443 = vpop.permute.xlu0 %442
        %446 = vset.pattern.permute.xlu0 0
        %447 = vperm.xlu0 %446, %v425
        %v448 = vpop.permute.xlu0 %447
        %v450 = vadd.f32 %v436, %v443
        %v451 = vadd.f32 %v437, %v443
        %v452 = vadd.f32 %v438, %v448
        %v453 = vadd.f32 %v439, %v448
        %454 = vst [vmem:[%s338] sm:$0xff] %v450
        %455 = vst [vmem:[%s338 + $0x8] sm:$0xff] %v451
        %456 = vst [vmem:[%s338 + $0x10] sm:$0xff] %v452
        %457 = vst [vmem:[%s338 + $0x18] sm:$0xff] %v453
        %s458 = sand.u32 %s230, 1
        %s459 = scalar_lea.sflag [#allocation3], %s458
        %s460 = sand.u32 %s230, 1
        %s461 = smul.addr %s460, 32
        %s462 = scalar_lea.vmem [#allocation2], %s461
        // Predicated region
        $region57: #{tpu_custom_call.1} parent=55 // pred_check
          %p463 = pneg %p240
        $region58: #{tpu_custom_call.1} parent=55 // pred_check_branch
          %465 = sbr.rel (%p463) target = $region60
        $region59: #{tpu_custom_call.1} parent=55 // pred_region
          %s467 = ssub.s32 512, 512
          %468 = vsyncadd %s459, %s467
          %s469 = smul.addr %s23, 4
          %s470 = smul.addr %s469, 128
          %s471 = scalar_lea.hbm %s9, %s470
          %s472 = sshll.u32 %s462, 4
          %s473 = int_to_ptr.vmem [resolvable:$true] %s472
          %478 = dma.vmem_to_hbm [thread:$0]  %s473, 512, %s471, %s459, 256, 256, 16
        $region60: #{tpu_custom_call.1} parent=55 // pred_fallthru
          _
      $region56: #{tpu_custom_call.1} parent=5 // pred_fallthru
        _
      %p479 = scmp.le.s32.totalorder 2, %s18
      // Predicated region
      $region61: #{tpu_custom_call.1} parent=5 // pred_check
        %p480 = pneg %p479
      $region62: #{tpu_custom_call.1} parent=5 // pred_check_branch
        %482 = sbr.rel (%p480) target = $region64
      $region63: #{tpu_custom_call.1} parent=5 // pred_region
        %s483 = ssub.s32 %s18, 2
        // Predicated region
        $region65: #{tpu_custom_call.1} parent=63 // pred_check
          %p484 = pneg %p246
        $region66: #{tpu_custom_call.1} parent=63 // pred_check_branch
          %486 = sbr.rel (%p484) target = $region68
        $region67: #{tpu_custom_call.1} parent=63 // pred_region
          %s487 = sand.u32 %s231, 1
          %s488 = scalar_lea.sflag [#allocation3], %s487
          %s489 = sand.u32 %s231, 1
          %s490 = smul.addr %s489, 32
          %s491 = scalar_lea.vmem [#allocation2], %s490
          %492 = dma.done %s488, 512
        $region68: #{tpu_custom_call.1} parent=63 // pred_fallthru
          _
      $region64: #{tpu_custom_call.1} parent=5 // pred_fallthru
        _
    $region6: #{tpu_custom_call.1} parent=1 // loop_footer
      %s22 = sadd.s32 1, %s18
    $region7: #{tpu_custom_call.1} parent=1 // loop_footer_branch
      %17 = sbr.rel target = $region3
    $region8: #{tpu_custom_call.1} parent=1 // loop_exit
      _
    %493 = vsyncpa [#allocation3], 1
    %s494 = scalar_lea.sflag [#allocation3], 1
    %495 = vsyncpa %s494, 1

</llo_original>
